<compile_context>
chip_gen: v7x
topology: tpu7x:2x2x1
jax: 0.10.0
libtpu: 0.0.40
codegen_flags: <defaults>
</compile_context>

<pallas_src>
import functools

import jax
import jax.numpy as jnp
from jax.experimental import pallas as pl
from jax.experimental.pallas import tpu as pltpu

GAMMA = 2.0
BETA = 0.9999


def _round_up(x, m):
    return ((x + m - 1) // m) * m


def _focal_pow(one_minus_pt, gamma):
    # (1 - pt) ** gamma without the exp/log float-pow path (NaN hazard when pt
    # rounds to just above 1).  gamma is a static Python float.
    if gamma == 2.0:
        return jnp.square(one_minus_pt)
    if float(gamma).is_integer() and gamma >= 0:
        return jax.lax.integer_pow(one_minus_pt, int(gamma))
    return jnp.power(jnp.maximum(one_minus_pt, 0.0), jnp.float32(gamma))


def _focal_loss_kernel(x_ref, t_ref, en_ref, out_ref, *,
                       n_true, tile_rows, n_classes, gamma):
    # x_ref:   (C, R, 128)  logits; class = outer axis, samples packed (sublane, lane)
    # t_ref:   (R, 128)     int32 class indices
    # en_ref:  (C,)         effective_num class weights (SMEM scalars)
    # out_ref: (1, 1, 128)  per-lane partial loss sum for this block
    i = pl.program_id(0)
    t = t_ref[...]

    # Per-class slabs (C is a small static constant -> unrolled in the trace);
    # everything below is elementwise VPU / EUP work, no cross-lane ops.
    xs = [x_ref[c].astype(jnp.float32) for c in range(n_classes)]

    # Numerically-stable log-softmax over the class axis.
    m = xs[0]
    for c in range(1, n_classes):
        m = jnp.maximum(m, xs[c])
    zs = [x - m for x in xs]
    es = [jnp.exp(z) for z in zs]
    s = es[0]
    for c in range(1, n_classes):
        s = s + es[c]

    # Gather target-class quantities with compare/select chains (no one-hot,
    # no sublane reductions).  exp(z_target) is reused for pt (no second exp).
    z_sel = zs[n_classes - 1]
    e_sel = es[n_classes - 1]
    at = jnp.full_like(m, en_ref[n_classes - 1])
    for c in range(n_classes - 2, -1, -1):
        hit = t == c
        z_sel = jnp.where(hit, zs[c], z_sel)
        e_sel = jnp.where(hit, es[c], e_sel)
        at = jnp.where(hit, en_ref[c], at)

    logpt = z_sel - jnp.log(s)          # gathered log_softmax at the target
    pt = e_sel / s                      # exp(logpt) without a second exp
    loss = -_focal_pow(1.0 - pt, gamma) * (logpt * at)      # (R, 128)

    # Mask padded / out-of-range samples.  Select-based (not multiply-based),
    # so garbage (even NaN/Inf) in a partial trailing block cannot leak in.
    row = jax.lax.broadcasted_iota(jnp.int32, loss.shape, 0)
    lane = jax.lax.broadcasted_iota(jnp.int32, loss.shape, 1)
    gidx = (i * tile_rows + row) * 128 + lane
    loss = jnp.where(gidx < n_true, loss, 0.0)

    # Per-lane partial: reduce over the row (sublane) axis only; the tiny
    # 128-wide + num_blocks reduction happens in the wrapper.
    out_ref[...] = jnp.sum(loss, axis=0, keepdims=True)[None]


def _choose_tile_rows(rows_total, max_rows=512):
    """Rows-of-128-samples per grid step.

    max_rows=512 -> 65536 samples per block; double-buffered f32 inputs are
    ~2 MiB, comfortably inside every generation's scoped-VMEM default while
    amortizing the ~0.35 us per-grid-step pipeline overhead.  Whenever there
    is enough work we keep >= 2 balanced blocks so the "parallel" grid axis
    can be sharded across both TensorCores on v7x.
    """
    if rows_total < 16:
        return rows_total                               # single (full-dim) block
    balanced = _round_up(pl.cdiv(rows_total, 2), 8)     # 2 balanced blocks
    return int(min(max_rows, balanced))


def focal_loss(logits, target, effective_num, *, gamma=GAMMA, size_average=True):
    """logits: (N, C) or (B, S, C) float; target: int class ids; effective_num: (C,)."""
    assert logits.ndim in (2, 3), "input dimension should be either 2 or 3!"
    if logits.ndim == 3:
        logits = logits.reshape(-1, logits.shape[-1])
    n, c = logits.shape
    target = target.reshape(-1).astype(jnp.int32)
    en = effective_num.reshape(c).astype(jnp.float32)

    n128 = _round_up(n, 128)
    rows_total = n128 // 128
    tile_rows = _choose_tile_rows(rows_total)
    num_blocks = pl.cdiv(rows_total, tile_rows)

    # Lane-dense (C, rows, 128) slab: transpose + (<=127 sample) pad + reshape
    # fuse into a single XLA pass.  The incoming dtype is kept (bf16 passes
    # through; the f32 upcast happens in-register inside the kernel).
    x3 = jnp.pad(logits.T, ((0, 0), (0, n128 - n))).reshape(c, rows_total, 128)
    t3 = jnp.pad(target, (0, n128 - n)).reshape(rows_total, 128)

    # Explicit VMEM budget: double-buffered input blocks + elementwise temps.
    itemsize = jnp.dtype(logits.dtype).itemsize
    slab = tile_rows * 128 * 4
    need = (2 * (c * tile_rows * 128 * itemsize + tile_rows * 128 * 4)
            + 14 * slab + (2 << 20))
    vmem_limit = int(min(max(need, 4 << 20), 32 << 20))

    kernel = functools.partial(
        _focal_loss_kernel, n_true=n, tile_rows=tile_rows,
        n_classes=c, gamma=float(gamma))

    partials = pl.pallas_call(
        kernel,
        out_shape=jax.ShapeDtypeStruct((num_blocks, 1, 128), jnp.float32),
        grid=(num_blocks,),
        in_specs=[
            pl.BlockSpec((c, tile_rows, 128), lambda i: (0, i, 0)),   # logits
            pl.BlockSpec((tile_rows, 128), lambda i: (i, 0)),         # targets
            pl.BlockSpec(memory_space=pltpu.MemorySpace.SMEM),        # eff. num
        ],
        out_specs=pl.BlockSpec((1, 1, 128), lambda i: (i, 0, 0)),
        compiler_params=pltpu.CompilerParams(
            dimension_semantics=("parallel",),
            vmem_limit_bytes=vmem_limit,
        ),
    )(x3, t3, en)

    total = jnp.sum(partials)
    if size_average:
        return total / jnp.float32(n)
    return total


def _reference(logits, target, effective_num, gamma=GAMMA):
    logp = jax.nn.log_softmax(logits.astype(jnp.float32), axis=-1)
    logpt = jnp.take_along_axis(logp, target[:, None].astype(jnp.int32), axis=1)[:, 0]
    pt = jnp.exp(logpt)
    at = effective_num[target]
    loss = -1.0 * (1.0 - pt) ** gamma * (logpt * at)
    return loss.mean()


if __name__ == "__main__":
    key = jax.random.PRNGKey(0)
    k1, k2, k3, k4 = jax.random.split(key, 4)

    C = 3  # weight = torch.ones(3) in the module -> 3 classes
    # Deterministic parameter init mirroring __init__:
    # effective_num[i] = (1 - beta) / (1 - beta ** weight[i]), weight = ones(C)
    weight = jnp.ones((C,), dtype=jnp.float32)
    effective_num = (1.0 - BETA) / (1.0 - BETA ** weight)

    # Case 1: tiny 2-D input.
    N = 8
    logits = jax.random.normal(k1, (N, C), dtype=jnp.float32)
    target = jax.random.randint(k2, (N,), 0, C, dtype=jnp.int32)
    out = jax.block_until_ready(focal_loss(logits, target, effective_num))
    ref = _reference(logits, target, effective_num)
    assert jnp.allclose(out, ref, atol=1e-5, rtol=1e-5), (out, ref)

    # Case 2: 3-D input exercising the multi-block grid + tail-mask path.
    B, S = 2, 1000
    logits3 = jax.random.normal(k3, (B, S, C), dtype=jnp.float32)
    target3 = jax.random.randint(k4, (B * S,), 0, C, dtype=jnp.int32)
    out3 = jax.block_until_ready(focal_loss(logits3, target3, effective_num))
    ref3 = _reference(logits3.reshape(-1, C), target3, effective_num)
    assert jnp.allclose(out3, ref3, atol=1e-5, rtol=1e-5), (out3, ref3)

    print("KERNEL_OK")
</pallas_src>

<mosaic_0001>
module attributes {stable_mosaic.version = 11 : i64} {
  func.func @_focal_loss_kernel(%arg0: i32, %arg1: memref<3x1x128xf32, #tpu.memory_space<vmem>>, %arg2: memref<1x128xi32, #tpu.memory_space<vmem>>, %arg3: memref<3xf32, #tpu.memory_space<smem>>, %arg4: memref<1x1x128xf32, #tpu.memory_space<vmem>>) attributes {dimension_semantics = [#tpu.dimension_semantics<parallel>], iteration_bounds = array<i64: 1>, scalar_prefetch = 0 : i64, scratch_operands = 0 : i64, tpu.core_type = #tpu.core_type<tc>, window_params = [{transform_indices = @transform_0, window_bounds = array<i64: 3, 1, 128>}, {transform_indices = @transform_1, window_bounds = array<i64: 1, 128>}, {transform_indices = @transform_2, window_bounds = array<i64: 3>}, {transform_indices = @transform_3, window_bounds = array<i64: 1, 1, 128>}]} {
    %c0 = arith.constant 0 : index
    %c0_0 = arith.constant 0 : index
    %0 = vector.load %arg2[%c0, %c0_0] : memref<1x128xi32, #tpu.memory_space<vmem>>, vector<1x128xi32>
    %c0_1 = arith.constant 0 : index
    %c0_2 = arith.constant 0 : index
    %c0_3 = arith.constant 0 : index
    %1 = vector.load %arg1[%c0_1, %c0_2, %c0_3] : memref<3x1x128xf32, #tpu.memory_space<vmem>>, vector<1x1x128xf32>
    %2 = vector.shape_cast %1 : vector<1x1x128xf32> to vector<1x128xf32>
    %c1 = arith.constant 1 : index
    %c0_4 = arith.constant 0 : index
    %c0_5 = arith.constant 0 : index
    %3 = vector.load %arg1[%c1, %c0_4, %c0_5] : memref<3x1x128xf32, #tpu.memory_space<vmem>>, vector<1x1x128xf32>
    %4 = vector.shape_cast %3 : vector<1x1x128xf32> to vector<1x128xf32>
    %c2 = arith.constant 2 : index
    %c0_6 = arith.constant 0 : index
    %c0_7 = arith.constant 0 : index
    %5 = vector.load %arg1[%c2, %c0_6, %c0_7] : memref<3x1x128xf32, #tpu.memory_space<vmem>>, vector<1x1x128xf32>
    %6 = vector.shape_cast %5 : vector<1x1x128xf32> to vector<1x128xf32>
    %7 = arith.maximumf %2, %4 : vector<1x128xf32>
    %8 = arith.maximumf %7, %6 : vector<1x128xf32>
    %9 = arith.subf %2, %8 : vector<1x128xf32>
    %10 = arith.subf %4, %8 : vector<1x128xf32>
    %11 = arith.subf %6, %8 : vector<1x128xf32>
    %12 = math.exp %9 : vector<1x128xf32>
    %13 = math.exp %10 : vector<1x128xf32>
    %14 = math.exp %11 : vector<1x128xf32>
    %15 = arith.addf %12, %13 : vector<1x128xf32>
    %16 = arith.addf %15, %14 : vector<1x128xf32>
    %c2_8 = arith.constant 2 : index
    %17 = memref.load %arg3[%c2_8] : memref<3xf32, #tpu.memory_space<smem>>
    %18 = vector.broadcast %17 : f32 to vector<1x128xf32>
    %c1_i32 = arith.constant 1 : i32
    %19 = vector.broadcast %c1_i32 : i32 to vector<1x128xi32>
    %20 = arith.cmpi eq, %0, %19 : vector<1x128xi32>
    %21 = arith.select %20, %10, %11 : vector<1x128xi1>, vector<1x128xf32>
    %22 = arith.select %20, %13, %14 : vector<1x128xi1>, vector<1x128xf32>
    %c1_9 = arith.constant 1 : index
    %23 = memref.load %arg3[%c1_9] : memref<3xf32, #tpu.memory_space<smem>>
    %24 = vector.broadcast %23 : f32 to vector<1x128xf32>
    %25 = arith.select %20, %24, %18 : vector<1x128xi1>, vector<1x128xf32>
    %c0_i32 = arith.constant 0 : i32
    %26 = vector.broadcast %c0_i32 : i32 to vector<1x128xi32>
    %27 = arith.cmpi eq, %0, %26 : vector<1x128xi32>
    %28 = arith.select %27, %9, %21 : vector<1x128xi1>, vector<1x128xf32>
    %29 = arith.select %27, %12, %22 : vector<1x128xi1>, vector<1x128xf32>
    %c0_10 = arith.constant 0 : index
    %30 = memref.load %arg3[%c0_10] : memref<3xf32, #tpu.memory_space<smem>>
    %31 = vector.broadcast %30 : f32 to vector<1x128xf32>
    %32 = arith.select %27, %31, %25 : vector<1x128xi1>, vector<1x128xf32>
    %33 = math.log %16 : vector<1x128xf32>
    %34 = arith.subf %28, %33 : vector<1x128xf32>
    %35 = arith.divf %29, %16 : vector<1x128xf32>
    %cst = arith.constant 1.000000e+00 : f32
    %36 = vector.broadcast %cst : f32 to vector<1x128xf32>
    %37 = arith.subf %36, %35 : vector<1x128xf32>
    %38 = arith.mulf %37, %37 : vector<1x128xf32>
    %cst_11 = arith.constant 0.000000e+00 : f32
    %39 = vector.broadcast %cst_11 : f32 to vector<1x128xf32>
    %40 = arith.subf %39, %38 : vector<1x128xf32>
    %41 = arith.mulf %34, %32 : vector<1x128xf32>
    %42 = arith.mulf %40, %41 : vector<1x128xf32>
    %43 = tpu.iota {dimensions = array<i32: 0>} : vector<1x128xi32>
    %44 = tpu.iota {dimensions = array<i32: 1>} : vector<1x128xi32>
    %c1_i32_12 = arith.constant 1 : i32
    %45 = arith.muli %arg0, %c1_i32_12 : i32
    %46 = vector.broadcast %45 : i32 to vector<1x128xi32>
    %47 = arith.addi %46, %43 : vector<1x128xi32>
    %c128_i32 = arith.constant 128 : i32
    %48 = vector.broadcast %c128_i32 : i32 to vector<1x128xi32>
    %49 = arith.muli %47, %48 : vector<1x128xi32>
    %50 = arith.addi %49, %44 : vector<1x128xi32>
    %c8_i32 = arith.constant 8 : i32
    %51 = vector.broadcast %c8_i32 : i32 to vector<1x128xi32>
    %52 = arith.cmpi slt, %50, %51 : vector<1x128xi32>
    %cst_13 = arith.constant 0.000000e+00 : f32
    %53 = vector.broadcast %cst_13 : f32 to vector<1x128xf32>
    %54 = arith.select %52, %42, %53 : vector<1x128xi1>, vector<1x128xf32>
    %cst_14 = arith.constant dense<0.000000e+00> : vector<128xf32>
    %55 = vector.multi_reduction <add>, %54, %cst_14 [0] : vector<1x128xf32> to vector<128xf32>
    %56 = vector.shape_cast %55 : vector<128xf32> to vector<1x128xf32>
    %57 = vector.shape_cast %56 : vector<1x128xf32> to vector<1x1x128xf32>
    %c0_15 = arith.constant 0 : index
    %c0_16 = arith.constant 0 : index
    %c0_17 = arith.constant 0 : index
    %58 = vector.load %arg4[%c0_15, %c0_16, %c0_17] : memref<1x1x128xf32, #tpu.memory_space<vmem>>, vector<1x1x128xf32>
    tpu.vector_store %arg4[%c0_15, %c0_16, %c0_17], %57 {strides = array<i32>} : memref<1x1x128xf32, #tpu.memory_space<vmem>>, vector<1x1x128xf32>,
    return
  }
  func.func @transform_0(%arg0: i32) -> (i32, i32, i32) {
    %c0_i32 = arith.constant 0 : i32
    %c0_i32_0 = arith.constant 0 : i32
    %c0_i32_1 = arith.constant 0 : i32
    return %c0_i32, %arg0, %c0_i32_0 : i32, i32, i32
  }
  func.func @transform_1(%arg0: i32) -> (i32, i32) {
    %c0_i32 = arith.constant 0 : i32
    %c0_i32_0 = arith.constant 0 : i32
    return %arg0, %c0_i32 : i32, i32
  }
  func.func @transform_2(%arg0: i32) -> i32 {
    %c0_i32 = arith.constant 0 : i32
    %c0_i32_0 = arith.constant 0 : i32
    return %c0_i32 : i32
  }
  func.func @transform_3(%arg0: i32) -> (i32, i32, i32) {
    %c0_i32 = arith.constant 0 : i32
    %c0_i32_0 = arith.constant 0 : i32
    %c0_i32_1 = arith.constant 0 : i32
    return %arg0, %c0_i32, %c0_i32_0 : i32, i32, i32
  }
}

</mosaic_0001>

<llo_original>
// kernel: tpu_custom_call.1
$region0: #{tpu_custom_call.1}
  #allocation0 [shape = 'u32[]', space=smem, size = 0x4, offset = 0x4, fixed_abs, tag = 'smem constant byte address 0x4 - core index']
  #allocation1 [shape = 'u32[144,128]{1,0:T(1,128)}', space=vmem, size = 0x12000, scoped, tag = 'internal scratch']
  %s0 = inlined_call_operand.hbm [shape: f32[3,1,128], index: 0, kind: input, shape index: {}]
  %s1 = inlined_call_operand.vmem [shape: s32[1,128], index: 1, kind: input, shape index: {}]
  %s2 = inlined_call_operand.vmem [shape: f32[3], index: 2, kind: input, shape index: {}]
  %s3 = inlined_call_operand.hbm [shape: f32[1,1,128], index: 3, kind: output, shape index: {}]
  %s4 = sld [smem:[#allocation0]]
  $region30: #{tpu_custom_call.1} parent=0
    _
  %s6 = ssub.s32 1, %s4
  %s7 = scalar_select 0, %s6, %s4
  $region1: #{tpu_custom_call.1} parent=0
    #allocation2 [shape = 'u8[1536]{0}', space=vmem, size = 0x800, scoped, tag = 'input window, operand 0, single buffered']
    #allocation3 [shape = 's32[1]{0}', space=sflag, size = 0x4, scoped, tag = 'scoped memory for tpu_custom_call.1']
    #allocation4 [shape = 's32[1]{0}', space=sflag, size = 0x4, scoped, tag = 'scoped memory for tpu_custom_call.1']
    #allocation5 [shape = 's32[1]{0}', space=sflag, size = 0x4, scoped, tag = 'scoped memory for tpu_custom_call.1']
    #allocation6 [shape = 'u8[512]{0}', space=smem, size = 0x200, scoped, tag = 'input window, operand 2, single buffered']
    #allocation7 [shape = 'u8[512]{0}', space=vmem, size = 0x400, scoped, tag = 'output window, operand 0, single buffered']
    %8 = vsyncpa [#allocation3], 0
    %9 = vsyncpa [#allocation5], 0
    %10 = vsyncpa [#allocation4], 0
    // Predicated region
    $region2: #{tpu_custom_call.1} parent=1 // pred_check
      _
    $region3: #{tpu_custom_call.1} parent=1 // pred_check_branch
      %12 = sbr.rel (0) target = $region5
    $region4: #{tpu_custom_call.1} parent=1 // pred_region
      %s14 = ssub.s32 48, 48
      %15 = vsyncadd [#allocation3], %s14
      %s16 = sshll.u32 [#allocation2], 4
      %s17 = int_to_ptr.vmem [resolvable:$true] %s16
      %22 = dma.hbm_to_vmem [thread:$0]  %s0, 48, %s17, [#allocation3], 16, 16, 1
    $region5: #{tpu_custom_call.1} parent=1 // pred_fallthru
      _
    // Predicated region
    $region6: #{tpu_custom_call.1} parent=1 // pred_check
      _
    $region7: #{tpu_custom_call.1} parent=1 // pred_check_branch
      %24 = sbr.rel (0) target = $region9
    $region8: #{tpu_custom_call.1} parent=1 // pred_region
      _
    $region9: #{tpu_custom_call.1} parent=1 // pred_fallthru
      _
    // Predicated region
    $region10: #{tpu_custom_call.1} parent=1 // pred_check
      _
    $region11: #{tpu_custom_call.1} parent=1 // pred_check_branch
      %26 = sbr.rel (0) target = $region13
    $region12: #{tpu_custom_call.1} parent=1 // pred_region
      %s28 = ssub.s32 16, 16
      %29 = vsyncadd [#allocation5], %s28
      %s31 = sshll.u32 %s2, 4
      %s32 = int_to_ptr.vmem [resolvable:$true] %s31
      %34 = dma.vmem_to_smem %s32, 16, [#allocation6], [#allocation5]
    $region13: #{tpu_custom_call.1} parent=1 // pred_fallthru
      _
    // Predicated region
    $region14: #{tpu_custom_call.1} parent=1 // pred_check
      _
    $region15: #{tpu_custom_call.1} parent=1 // pred_check_branch
      %36 = sbr.rel (0) target = $region17
    $region16: #{tpu_custom_call.1} parent=1 // pred_region
      %37 = dma.done [#allocation3], 48
    $region17: #{tpu_custom_call.1} parent=1 // pred_fallthru
      _
    // Predicated region
    $region18: #{tpu_custom_call.1} parent=1 // pred_check
      _
    $region19: #{tpu_custom_call.1} parent=1 // pred_check_branch
      %39 = sbr.rel (0) target = $region21
    $region20: #{tpu_custom_call.1} parent=1 // pred_region
      %40 = dma.done [#allocation5], 16
    $region21: #{tpu_custom_call.1} parent=1 // pred_fallthru
      _
    %41 = sfence
    %v42 = vld [vmem:[%s1] sm:$0x1]
    %v43 = vld [vmem:[#allocation2] sm:$0x1]
    %s44 = scalar_lea.vmem [#allocation2], 1
    %v45 = vld [vmem:[%s44] sm:$0x1]
    %s46 = scalar_lea.vmem [#allocation2], 2
    %v47 = vld [vmem:[%s46] sm:$0x1]
    %v48 = vmax.f32 %v43, %v45
    %v49 = vmax.f32 %v48, %v47
    %v50 = vsub.f32 %v43, %v49
    %v51 = vsub.f32 %v45, %v49
    %v52 = vsub.f32 %v47, %v49
    %v53 = vmul.f32 %v50, 1.442695
    %v54 = vpow.pop %v53
    %v55 = vmul.f32 %v51, 1.442695
    %v56 = vpow.pop %v55
    %v57 = vmul.f32 %v52, 1.442695
    %v58 = vpow.pop %v57
    %v59 = vadd.f32 %v54, %v56
    %v60 = vadd.f32 %v59, %v58
    %s61 = sld [smem:[#allocation6 + $0x2]]
    %v62 = vstv %s61
    %vm63 = vcmp.eq.s32.totalorder %v42, 1
    %v64 = vsel %vm63, %v51, %v52
    %v65 = vsel %vm63, %v56, %v58
    %s66 = sld [smem:[#allocation6 + $0x1]]
    %v67 = vstv %s66
    %v68 = vsel %vm63, %v67, %v62
    %vm69 = vcmp.eq.s32.totalorder %v42, 0
    %v70 = vsel %vm69, %v50, %v64
    %v71 = vsel %vm69, %v54, %v65
    %s72 = sld [smem:[#allocation6]]
    %v73 = vstv %s72
    %v74 = vsel %vm69, %v73, %v68
    %v75 = vlog2.pop %v60
    %v76 = vmul.f32 %v75, 0.6931472
    %v77 = vsub.f32 %v70, %v76
    %v78 = vrcp.pop %v60
    %v79 = vmul.f32 %v71, %v78
    %v80 = vsub.f32 1.0, %v79
    %v81 = vmul.f32 %v80, %v80
    %v82 = vsub.f32 0.0, %v81
    %v83 = vmul.f32 %v77, %v74
    %v84 = vmul.f32 %v82, %v83
    %v85 = vlaneseq
    %v86 = vshrl.u32 %v85, 7
    %v87 = vlaneseq
    %v88 = vand.u32 %v87, 127
    %v89 = vstv 0
    %v90 = vadd.s32 %v89, %v86
    %v91 = vmul.u32 %v90, 128
    %v92 = vadd.s32 %v91, %v88
    %vm93 = vcmp.lt.s32.totalorder %v92, 8
    %v94 = vsel %vm93, %v84, 0.0
    %v95 = vadd.f32 %v94, 0.0
    %96 = vst [vmem:[#allocation7] sm:$0x1] %v95
    // Predicated region
    $region22: #{tpu_custom_call.1} parent=1 // pred_check
      _
    $region23: #{tpu_custom_call.1} parent=1 // pred_check_branch
      %98 = sbr.rel (0) target = $region25
    $region24: #{tpu_custom_call.1} parent=1 // pred_region
      %s100 = ssub.s32 16, 16
      %101 = vsyncadd [#allocation4], %s100
      %s103 = sshll.u32 [#allocation7], 4
      %s104 = int_to_ptr.vmem [resolvable:$true] %s103
      %106 = dma.vmem_to_hbm [thread:$0]  %s104, 16, %s3, [#allocation4]
    $region25: #{tpu_custom_call.1} parent=1 // pred_fallthru
      _
    // Predicated region
    $region26: #{tpu_custom_call.1} parent=1 // pred_check
      _
    $region27: #{tpu_custom_call.1} parent=1 // pred_check_branch
      %108 = sbr.rel (0) target = $region29
    $region28: #{tpu_custom_call.1} parent=1 // pred_region
      %109 = dma.done [#allocation4], 16
    $region29: #{tpu_custom_call.1} parent=1 // pred_fallthru
      _
    %110 = vsyncpa [#allocation3], 1
    %111 = vsyncpa [#allocation4], 1
    %112 = vsyncpa [#allocation5], 1

</llo_original>
